<compile_context>
chip_gen: v7x
topology: tpu7x:2x2x1
jax: 0.10.0
libtpu: 0.0.40
codegen_flags: <defaults>
</compile_context>

<pallas_src>
import functools

import jax
import jax.numpy as jnp
from jax.experimental import pallas as pl
from jax.experimental.pallas import tpu as pltpu


def _mad_loss_kernel(x_ref, t_ref, o_ref, *,
                     steps, block_rows, rows, out_sub, need_mask):
    j = pl.program_id(1)

    @pl.when(j == 0)
    def _():
        o_ref[...] = jnp.zeros_like(o_ref)

    x = x_ref[...].astype(jnp.float32)
    t = t_ref[...].astype(jnp.float32)
    absdiff = jnp.abs(t - jax.nn.sigmoid(x))

    def lane_partials(vals):
        # (block_rows, width) -> (out_sub, width).  For out_sub == 8 the
        # reshape is layout-preserving (groups of 8 rows == one sublane tile)
        # and the reduce is pure VALU vreg adds; the final 8 -> 1 sublane and
        # cross-lane reduces are deferred to the (tiny) wrapper-side jnp.sum.
        if out_sub == 1:
            return jnp.sum(vals, axis=0, keepdims=True)
        return vals.reshape(block_rows // out_sub, out_sub,
                            vals.shape[-1]).sum(axis=0)

    if need_mask:
        i = pl.program_id(0)
        row_base = (i * steps + j) * block_rows
        is_edge = row_base + block_rows > rows  # partial edge or clamped dup

        @pl.when(jnp.logical_not(is_edge))
        def _():
            # Interior block: no per-element mask cost.
            o_ref[...] += lane_partials(absdiff)[None]

        @pl.when(is_edge)
        def _():
            # Boundary / fully-clamped duplicate block: zero out rows that
            # fall past the logical end of the slab.
            row_idx = row_base + jax.lax.broadcasted_iota(
                jnp.int32, (block_rows, 1), 0)
            masked = jnp.where(row_idx < rows, absdiff, 0.0)
            o_ref[...] += lane_partials(masked)[None]
    else:
        o_ref[...] += lane_partials(absdiff)[None]


def _tensorcore_count():
    """Best-effort TensorCore-per-chip count (1 on v5e/v6e, 2 on v7x)."""
    try:
        info = pltpu.get_tpu_info()
        for name in ("num_cores", "core_count", "cores_per_chip",
                     "tensorcores_per_chip", "num_tensorcores"):
            v = getattr(info, name, None)
            if v:
                return int(v)
    except Exception:
        pass
    try:
        v = getattr(jax.devices()[0], "num_cores", None)
        if v:
            return int(v)
    except Exception:
        pass
    return 1


def _physical_vmem_bytes():
    try:
        v = getattr(pltpu.get_tpu_info(), "vmem_capacity_bytes", None)
        if v:
            return int(v)
    except Exception:
        pass
    return 64 << 20  # conservative: v7x per-TensorCore VMEM


def mad_loss(inp, target, size_average=True, *,
             block_rows=None, width=512, num_chunks=None):
    assert inp.shape == target.shape
    numel = inp.size
    assert numel > 0
    assert width % 128 == 0

    x = jnp.ravel(inp)
    t = jnp.ravel(target)

    rows = numel // width                 # full lane-dense rows
    tail = numel - rows * width           # < width leftover elements

    if rows == 0:
        # Smaller than one lane row: not worth a kernel launch.
        loss = jnp.sum(jnp.abs(t.astype(jnp.float32)
                               - jax.nn.sigmoid(x.astype(jnp.float32))))
        return loss / numel if size_average else loss

    # Aligned prefix only (no pad concatenate of the whole array); the ragged
    # tail is summed below in plain jnp.
    x2 = x[:rows * width].reshape(rows, width)
    t2 = t[:rows * width].reshape(rows, width)

    bytes_per_row = width * (x2.dtype.itemsize + t2.dtype.itemsize)

    # ~8 MiB of input DMA per grid step regardless of dtype (bf16 -> 2x rows);
    # keep block_rows a multiple of 16 for sub-32-bit sublane packing.
    if block_rows is None:
        block_rows = max(16, ((8 << 20) // bytes_per_row) // 16 * 16)

    # Fit the double-buffered working set into this generation's VMEM with
    # headroom (v7x: 64 MiB/TC -> cap 48 MiB; v5e/v6e: 128 MiB -> cap 96 MiB).
    vmem_cap = min(_physical_vmem_bytes() * 3 // 4, 96 << 20)
    while block_rows > 16 and 2 * block_rows * bytes_per_row + (2 << 20) > vmem_cap:
        block_rows //= 2

    block_rows = min(block_rows, rows)      # small inputs: one full block
    assert block_rows % 8 == 0 or block_rows == rows, (
        "block_rows must be a multiple of 8 (or cover all rows)")

    nb = pl.cdiv(rows, block_rows)          # number of row blocks

    # One chunk per TensorCore unless overridden: 1 on v5e/v6e (avoids the
    # clamped duplicate block + mask), 2 on v7x for megacore HBM sharding.
    if num_chunks is None:
        num_chunks = _tensorcore_count()
    num_chunks = max(1, min(num_chunks, nb))  # leading ("parallel") axis
    steps = pl.cdiv(nb, num_chunks)           # reduction ("arbitrary") axis
    need_mask = (nb * block_rows != rows) or (num_chunks * steps != nb)

    out_sub = 8 if block_rows % 8 == 0 else 1

    def in_index(i, j):
        # Clamp so fully out-of-range logical blocks re-read the last valid
        # block; their contribution is masked to zero inside the kernel.
        return (jnp.minimum(i * steps + j, nb - 1), 0)

    kernel = functools.partial(
        _mad_loss_kernel, steps=steps, block_rows=block_rows, rows=rows,
        out_sub=out_sub, need_mask=need_mask)

    tile_bytes = block_rows * bytes_per_row
    vmem_limit = int(min(max(2 * tile_bytes + (4 << 20), 32 << 20), vmem_cap))

    cost = pl.CostEstimate(
        flops=6 * rows * width,
        transcendentals=rows * width,
        bytes_accessed=int(rows * bytes_per_row
                           + num_chunks * out_sub * width * 4),
    )

    partials = pl.pallas_call(
        kernel,
        out_shape=jax.ShapeDtypeStruct((num_chunks, out_sub, width),
                                       jnp.float32),
        grid_spec=pltpu.PrefetchScalarGridSpec(
            num_scalar_prefetch=0,
            grid=(num_chunks, steps),
            in_specs=[
                pl.BlockSpec((block_rows, width), in_index),
                pl.BlockSpec((block_rows, width), in_index),
            ],
            out_specs=pl.BlockSpec((1, out_sub, width), lambda i, j: (i, 0, 0)),
        ),
        compiler_params=pltpu.CompilerParams(
            dimension_semantics=("parallel", "arbitrary"),
            vmem_limit_bytes=vmem_limit,
        ),
        cost_estimate=cost,
    )(x2, t2)

    loss = jnp.sum(partials)                # <= num_chunks * 8 * width partials
    if tail:
        xt = x[rows * width:].astype(jnp.float32)
        tt = t[rows * width:].astype(jnp.float32)
        loss = loss + jnp.sum(jnp.abs(tt - jax.nn.sigmoid(xt)))
    if size_average:
        loss = loss / numel
    return loss


def _mad_loss_ref(inp, target, size_average=True):
    diff = jnp.abs(target.astype(jnp.float32)
                   - jax.nn.sigmoid(inp.astype(jnp.float32)))
    loss = jnp.sum(diff)
    if size_average:
        loss = loss / inp.size
    return loss


if __name__ == "__main__":
    key = jax.random.PRNGKey(0)
    k1, k2, k3, k4, k5, k6 = jax.random.split(key, 6)

    # NCHW, batch=2, channels=4, spatial=16x16 — default config; the block
    # auto-shrinks to the 4x512 slab this small input produces.
    x = jax.random.normal(k1, (2, 4, 16, 16), dtype=jnp.float32)
    t = jax.random.uniform(k2, (2, 4, 16, 16), dtype=jnp.float32)

    loss = jax.block_until_ready(mad_loss(x, t, size_average=True))
    ref = _mad_loss_ref(x, t, size_average=True)
    assert jnp.allclose(loss, ref, rtol=1e-5, atol=1e-6), (loss, ref)

    loss2 = jax.block_until_ready(mad_loss(x, t, size_average=False))
    ref2 = _mad_loss_ref(x, t, size_average=False)
    assert jnp.allclose(loss2, ref2, rtol=1e-5, atol=1e-5), (loss2, ref2)

    # Ragged shape, explicit small tiles: exercises the no-pad tail path, the
    # pl.when-gated boundary mask (rows=14, block_rows=8 -> partial last block)
    # and the (8, width) partials.
    xr = jax.random.normal(k3, (3, 4, 9, 17), dtype=jnp.float32)
    tr = jax.random.uniform(k4, (3, 4, 9, 17), dtype=jnp.float32)
    loss3 = jax.block_until_ready(
        mad_loss(xr, tr, size_average=True, block_rows=8, width=128))
    ref3 = _mad_loss_ref(xr, tr, size_average=True)
    assert jnp.allclose(loss3, ref3, rtol=1e-5, atol=1e-6), (loss3, ref3)

    # Ragged shape with all defaults: default width=512 -> rows=3, tail=300.
    loss3b = jax.block_until_ready(mad_loss(xr, tr, size_average=True))
    assert jnp.allclose(loss3b, ref3, rtol=1e-5, atol=1e-6), (loss3b, ref3)

    # Odd block count with a forced 2-chunk split (nb=3, num_chunks=2):
    # exercises the clamped index_map where one chunk sees a fully
    # out-of-range logical block that must contribute 0.
    xo = jax.random.normal(k5, (2, 5, 16, 16), dtype=jnp.float32)
    to = jax.random.uniform(k6, (2, 5, 16, 16), dtype=jnp.float32)
    loss4 = jax.block_until_ready(
        mad_loss(xo, to, size_average=True,
                 block_rows=8, width=128, num_chunks=2))
    ref4 = _mad_loss_ref(xo, to, size_average=True)
    assert jnp.allclose(loss4, ref4, rtol=1e-5, atol=1e-6), (loss4, ref4)

    # bf16 inputs: no wrapper-side cast; the kernel casts per-tile.
    xb = xo.astype(jnp.bfloat16)
    tb = to.astype(jnp.bfloat16)
    loss5 = jax.block_until_ready(
        mad_loss(xb, tb, size_average=True, block_rows=8, width=128))
    ref5 = _mad_loss_ref(xb, tb, size_average=True)
    assert jnp.allclose(loss5, ref5, rtol=1e-5, atol=1e-6), (loss5, ref5)

    print("KERNEL_OK")
</pallas_src>

<mosaic_0001>
module attributes {stable_mosaic.version = 11 : i64} {
  func.func @_mad_loss_kernel(%arg0: i32, %arg1: i32, %arg2: memref<4x512xf32, #tpu.memory_space<vmem>>, %arg3: memref<4x512xf32, #tpu.memory_space<vmem>>, %arg4: memref<1x1x512xf32, #tpu.memory_space<vmem>>) attributes {dimension_semantics = [#tpu.dimension_semantics<parallel>, #tpu.dimension_semantics<arbitrary>], iteration_bounds = array<i64: 1, 1>, scalar_prefetch = 0 : i64, scratch_operands = 0 : i64, tpu.core_type = #tpu.core_type<tc>, window_params = [{transform_indices = @transform_0, window_bounds = array<i64: 4, 512>}, {transform_indices = @transform_1, window_bounds = array<i64: 4, 512>}, {transform_indices = @transform_2, window_bounds = array<i64: 1, 1, 512>}]} {
    %c0_i32 = arith.constant 0 : i32
    %0 = arith.cmpi eq, %arg1, %c0_i32 : i32
    %1 = arith.extui %0 : i1 to i32
    %c0_i32_0 = arith.constant 0 : i32
    %2 = arith.cmpi ne, %1, %c0_i32_0 : i32
    scf.if %2 {
      %cst_11 = arith.constant 0.000000e+00 : f32
      %18 = vector.broadcast %cst_11 : f32 to vector<1x1x512xf32>
      %c0_12 = arith.constant 0 : index
      %c0_13 = arith.constant 0 : index
      %c0_14 = arith.constant 0 : index
      %19 = vector.load %arg4[%c0_12, %c0_13, %c0_14] : memref<1x1x512xf32, #tpu.memory_space<vmem>>, vector<1x1x512xf32>
      tpu.vector_store %arg4[%c0_12, %c0_13, %c0_14], %18 {strides = array<i32>} : memref<1x1x512xf32, #tpu.memory_space<vmem>>, vector<1x1x512xf32>,
    } else {
    }
    %c0 = arith.constant 0 : index
    %c0_1 = arith.constant 0 : index
    %3 = vector.load %arg2[%c0, %c0_1] : memref<4x512xf32, #tpu.memory_space<vmem>>, vector<4x512xf32>
    %c0_2 = arith.constant 0 : index
    %c0_3 = arith.constant 0 : index
    %4 = vector.load %arg3[%c0_2, %c0_3] : memref<4x512xf32, #tpu.memory_space<vmem>>, vector<4x512xf32>
    %5 = arith.negf %3 : vector<4x512xf32>
    %6 = math.exp %5 : vector<4x512xf32>
    %cst = arith.constant 1.000000e+00 : f32
    %7 = vector.broadcast %cst : f32 to vector<4x512xf32>
    %8 = arith.addf %7, %6 : vector<4x512xf32>
    %9 = arith.divf %7, %8 : vector<4x512xf32>
    %10 = arith.subf %4, %9 : vector<4x512xf32>
    %11 = math.absf %10 : vector<4x512xf32>
    %c0_4 = arith.constant 0 : index
    %c0_5 = arith.constant 0 : index
    %c0_6 = arith.constant 0 : index
    %12 = vector.load %arg4[%c0_4, %c0_5, %c0_6] : memref<1x1x512xf32, #tpu.memory_space<vmem>>, vector<1x1x512xf32>
    %cst_7 = arith.constant dense<0.000000e+00> : vector<512xf32>
    %13 = vector.multi_reduction <add>, %11, %cst_7 [0] : vector<4x512xf32> to vector<512xf32>
    %14 = vector.shape_cast %13 : vector<512xf32> to vector<1x512xf32>
    %15 = vector.shape_cast %14 : vector<1x512xf32> to vector<1x1x512xf32>
    %16 = arith.addf %12, %15 : vector<1x1x512xf32>
    %c0_8 = arith.constant 0 : index
    %c0_9 = arith.constant 0 : index
    %c0_10 = arith.constant 0 : index
    %17 = vector.load %arg4[%c0_8, %c0_9, %c0_10] : memref<1x1x512xf32, #tpu.memory_space<vmem>>, vector<1x1x512xf32>
    tpu.vector_store %arg4[%c0_8, %c0_9, %c0_10], %16 {strides = array<i32>} : memref<1x1x512xf32, #tpu.memory_space<vmem>>, vector<1x1x512xf32>,
    return
  }
  func.func @transform_0(%arg0: i32, %arg1: i32) -> (i32, i32) {
    %c1_i32 = arith.constant 1 : i32
    %0 = arith.muli %arg0, %c1_i32 : i32
    %1 = arith.addi %0, %arg1 : i32
    %c0_i32 = arith.constant 0 : i32
    %2 = arith.minsi %1, %c0_i32 : i32
    %c0_i32_0 = arith.constant 0 : i32
    %c0_i32_1 = arith.constant 0 : i32
    return %2, %c0_i32_0 : i32, i32
  }
  func.func @transform_1(%arg0: i32, %arg1: i32) -> (i32, i32) {
    %c1_i32 = arith.constant 1 : i32
    %0 = arith.muli %arg0, %c1_i32 : i32
    %1 = arith.addi %0, %arg1 : i32
    %c0_i32 = arith.constant 0 : i32
    %2 = arith.minsi %1, %c0_i32 : i32
    %c0_i32_0 = arith.constant 0 : i32
    %c0_i32_1 = arith.constant 0 : i32
    return %2, %c0_i32_0 : i32, i32
  }
  func.func @transform_2(%arg0: i32, %arg1: i32) -> (i32, i32, i32) {
    %c0_i32 = arith.constant 0 : i32
    %c0_i32_0 = arith.constant 0 : i32
    %c0_i32_1 = arith.constant 0 : i32
    return %arg0, %c0_i32, %c0_i32_0 : i32, i32, i32
  }
}

</mosaic_0001>

<llo_original>
// kernel: tpu_custom_call.1
$region0: #{tpu_custom_call.1}
  #allocation0 [shape = 'u32[]', space=smem, size = 0x4, offset = 0x4, fixed_abs, tag = 'smem constant byte address 0x4 - core index']
  #allocation1 [shape = 'u32[144,128]{1,0:T(1,128)}', space=vmem, size = 0x12000, scoped, tag = 'internal scratch']
  %s0 = inlined_call_operand.hbm [shape: f32[4,512], index: 0, kind: input, shape index: {}]
  %s1 = inlined_call_operand.hbm [shape: f32[4,512], index: 1, kind: input, shape index: {}]
  %s2 = inlined_call_operand.hbm [shape: f32[1,1,512], index: 2, kind: output, shape index: {}]
  %s3 = sld [smem:[#allocation0]]
  $region30: #{tpu_custom_call.1} parent=0
    _
  %s5 = ssub.s32 1, %s3
  %s6 = scalar_select 0, %s5, %s3
  $region1: #{tpu_custom_call.1} parent=0
    #allocation2 [shape = 'u8[8192]{0}', space=vmem, size = 0x2000, scoped, tag = 'input window, operand 0, single buffered']
    #allocation3 [shape = 's32[1]{0}', space=sflag, size = 0x4, scoped, tag = 'scoped memory for tpu_custom_call.1']
    #allocation4 [shape = 's32[1]{0}', space=sflag, size = 0x4, scoped, tag = 'scoped memory for tpu_custom_call.1']
    #allocation5 [shape = 'u8[8192]{0}', space=vmem, size = 0x2000, scoped, tag = 'input window, operand 1, single buffered']
    #allocation6 [shape = 's32[1]{0}', space=sflag, size = 0x4, scoped, tag = 'scoped memory for tpu_custom_call.1']
    #allocation7 [shape = 'u8[2048]{0}', space=vmem, size = 0x800, scoped, tag = 'output window, operand 0, single buffered']
    %7 = vsyncpa [#allocation3], 0
    %8 = vsyncpa [#allocation6], 0
    %9 = vsyncpa [#allocation4], 0
    // Predicated region
    $region2: #{tpu_custom_call.1} parent=1 // pred_check
      _
    $region3: #{tpu_custom_call.1} parent=1 // pred_check_branch
      %11 = sbr.rel (0) target = $region5
    $region4: #{tpu_custom_call.1} parent=1 // pred_region
      %s12 = sadd.s32 0, 0
      %p13 = scmp.lt.s32.totalorder %s12, 0
      %s14 = scalar_select %p13, %s12, 0
      %s16 = ssub.s32 256, 256
      %17 = vsyncadd [#allocation3], %s16
      %s18 = smul.addr %s14, 4
      %s19 = smul.addr %s18, 64
      %s20 = scalar_lea.hbm %s0, %s19
      %s22 = sshll.u32 [#allocation2], 4
      %s23 = int_to_ptr.vmem [resolvable:$true] %s22
      %25 = dma.hbm_to_vmem [thread:$0]  %s20, 256, %s23, [#allocation3]
    $region5: #{tpu_custom_call.1} parent=1 // pred_fallthru
      _
    // Predicated region
    $region6: #{tpu_custom_call.1} parent=1 // pred_check
      _
    $region7: #{tpu_custom_call.1} parent=1 // pred_check_branch
      %27 = sbr.rel (0) target = $region9
    $region8: #{tpu_custom_call.1} parent=1 // pred_region
      %s28 = sadd.s32 0, 0
      %p29 = scmp.lt.s32.totalorder %s28, 0
      %s30 = scalar_select %p29, %s28, 0
      %s32 = ssub.s32 256, 256
      %33 = vsyncadd [#allocation6], %s32
      %s34 = smul.addr %s30, 4
      %s35 = smul.addr %s34, 64
      %s36 = scalar_lea.hbm %s1, %s35
      %s38 = sshll.u32 [#allocation5], 4
      %s39 = int_to_ptr.vmem [resolvable:$true] %s38
      %41 = dma.hbm_to_vmem [thread:$0]  %s36, 256, %s39, [#allocation6]
    $region9: #{tpu_custom_call.1} parent=1 // pred_fallthru
      _
    // Predicated region
    $region10: #{tpu_custom_call.1} parent=1 // pred_check
      _
    $region11: #{tpu_custom_call.1} parent=1 // pred_check_branch
      %43 = sbr.rel (0) target = $region13
    $region12: #{tpu_custom_call.1} parent=1 // pred_region
      %44 = dma.done [#allocation3], 256
    $region13: #{tpu_custom_call.1} parent=1 // pred_fallthru
      _
    // Predicated region
    $region14: #{tpu_custom_call.1} parent=1 // pred_check
      _
    $region15: #{tpu_custom_call.1} parent=1 // pred_check_branch
      %46 = sbr.rel (0) target = $region17
    $region16: #{tpu_custom_call.1} parent=1 // pred_region
      %47 = dma.done [#allocation6], 256
    $region17: #{tpu_custom_call.1} parent=1 // pred_fallthru
      _
    %s48 = sadd.s32 0, 0
    %p49 = scmp.lt.s32.totalorder %s48, 0
    %s50 = scalar_select %p49, %s48, 0
    %s51 = sadd.s32 0, 0
    %p52 = scmp.lt.s32.totalorder %s51, 0
    %s53 = scalar_select %p52, %s51, 0
    %p54 = scmp.eq.s32.totalorder 0, 0
    // Predicated region
    $region18: #{tpu_custom_call.1} parent=1 // pred_check
      %p55 = pneg %p54
    $region19: #{tpu_custom_call.1} parent=1 // pred_check_branch
      %57 = sbr.rel (%p55) target = $region21
    $region20: #{tpu_custom_call.1} parent=1 // pred_region
      %v58 = vlaneseq
      %vm59 = vcmp.ge.s32.totalorder %v58, 0
      %vm60 = vcmp.lt.s32.totalorder %v58, 512
      %vm61 = vmand %vm59, %vm60
      %62 = vst.msk [vmem:[#allocation7] sm:$0xf] %vm61, 0.0
    $region21: #{tpu_custom_call.1} parent=1 // pred_fallthru
      _
    %v63 = vld [vmem:[#allocation2] sm:$0xff]
    %v64 = vld [vmem:[#allocation2 + $0x8] sm:$0xff]
    %v65 = vld [vmem:[#allocation5] sm:$0xff]
    %v66 = vld [vmem:[#allocation5 + $0x8] sm:$0xff]
    %v67 = vxor.u32 %v63, 2147483648
    %v68 = vxor.u32 %v64, 2147483648
    %v69 = vmul.f32 %v67, 1.442695
    %v70 = vpow.pop %v69
    %v71 = vmul.f32 %v68, 1.442695
    %v72 = vpow.pop %v71
    %v73 = vadd.f32 %v70, 1.0
    %v74 = vadd.f32 %v72, 1.0
    %v75 = vrcp.pop %v73
    %v76 = vmul.f32 1.0, %v75
    %v77 = vrcp.pop %v74
    %v78 = vmul.f32 1.0, %v77
    %v79 = vsub.f32 %v65, %v76
    %v80 = vsub.f32 %v66, %v78
    %v81 = vand.u32 2147483647, %v79
    %v82 = vand.u32 2147483647, %v80
    %v83 = vld [vmem:[#allocation7] sm:$0xf]
    %v86 = vcombine.high %v81, %v81
    %v87 = vcombine.high %v82, %v82
    %vm90 = vcmask 1043456
    %v91 = vsel %vm90, %v81, 0.0
    %v92 = vrot.slane %v91, 4
    %v93 = vadd.f32 %v91, %v92
    %v94 = vrot.slane %v93, 2
    %v95 = vadd.f32 %v93, %v94
    %v96 = vrot.slane %v95, 1
    %v97 = vadd.f32 %v95, %v96
    %v98 = vsel %vm90, %v86, 0.0
    %v99 = vrot.slane %v98, 4
    %v100 = vadd.f32 %v98, %v99
    %v101 = vrot.slane %v100, 2
    %v102 = vadd.f32 %v100, %v101
    %v103 = vrot.slane %v102, 1
    %v104 = vadd.f32 %v102, %v103
    %v105 = vsel %vm90, %v82, 0.0
    %v106 = vrot.slane %v105, 4
    %v107 = vadd.f32 %v105, %v106
    %v108 = vrot.slane %v107, 2
    %v109 = vadd.f32 %v107, %v108
    %v110 = vrot.slane %v109, 1
    %v111 = vadd.f32 %v109, %v110
    %v112 = vsel %vm90, %v87, 0.0
    %v113 = vrot.slane %v112, 4
    %v114 = vadd.f32 %v112, %v113
    %v115 = vrot.slane %v114, 2
    %v116 = vadd.f32 %v114, %v115
    %v117 = vrot.slane %v116, 1
    %v118 = vadd.f32 %v116, %v117
    %v123 = vcombine.low %v97, %v104
    %v124 = vcombine.low %v111, %v118
    %v126 = vunpack.c.l.s4 1966171168
    %v127 = vunpack.c.0.s8 %v126
    %v128 = vlaneseq
    %v129 = vshrl.u32 %v128, 7
    %v130 = vsub.s32 %v127, %v129
    %v131 = vrot.slane %v123, %v130
    %v133 = vunpack.c.l.s4 1966171168
    %v134 = vunpack.c.0.s8 %v133
    %v135 = vlaneseq
    %v136 = vshrl.u32 %v135, 7
    %v137 = vsub.s32 %v134, %v136
    %v138 = vrot.slane %v124, %v137
    %v139 = vcombine.low %v131, %v138
    %v141 = vunpack.c.l.s4 1966171168
    %v142 = vunpack.c.0.s8 %v141
    %v143 = vlaneseq
    %v144 = vshrl.u32 %v143, 7
    %v145 = vsub.s32 %v142, %v144
    %v146 = vrot.slane %v139, %v145
    %v148 = vadd.f32 %v83, %v146
    %v149 = vlaneseq
    %vm150 = vcmp.ge.s32.totalorder %v149, 0
    %vm151 = vcmp.lt.s32.totalorder %v149, 512
    %vm152 = vmand %vm150, %vm151
    %153 = vst.msk [vmem:[#allocation7] sm:$0xf] %vm152, %v148
    // Predicated region
    $region22: #{tpu_custom_call.1} parent=1 // pred_check
      _
    $region23: #{tpu_custom_call.1} parent=1 // pred_check_branch
      %155 = sbr.rel (0) target = $region25
    $region24: #{tpu_custom_call.1} parent=1 // pred_region
      %s157 = ssub.s32 64, 64
      %158 = vsyncadd [#allocation4], %s157
      %s160 = sshll.u32 [#allocation7], 4
      %s161 = int_to_ptr.vmem [resolvable:$true] %s160
      %163 = dma.vmem_to_hbm [thread:$0]  %s161, 64, %s2, [#allocation4]
    $region25: #{tpu_custom_call.1} parent=1 // pred_fallthru
      _
    // Predicated region
    $region26: #{tpu_custom_call.1} parent=1 // pred_check
      _
    $region27: #{tpu_custom_call.1} parent=1 // pred_check_branch
      %165 = sbr.rel (0) target = $region29
    $region28: #{tpu_custom_call.1} parent=1 // pred_region
      %166 = dma.done [#allocation4], 64
    $region29: #{tpu_custom_call.1} parent=1 // pred_fallthru
      _
    %167 = vsyncpa [#allocation3], 1
    %168 = vsyncpa [#allocation6], 1
    %169 = vsyncpa [#allocation4], 1

</llo_original>
